<compile_context>
chip_gen: v6e
topology: v6e:2x2x1
jax: 0.10.0
libtpu: 0.0.40
codegen_flags: <defaults>
</compile_context>

<pallas_src>
import jax
import jax.numpy as jnp
from jax.experimental import pallas as pl
from jax.experimental.pallas import tpu as pltpu

_LANE = 128
_SUBLANE = 8


def _round_up(n, m):
    return ((n + m - 1) // m) * m


def _leaky_relu(z, slope=0.2):
    # nn.LeakyReLU(0.2): z if z > 0 else 0.2 * z  (elementwise, VPU, f32)
    return jnp.where(z > 0, z, slope * z)


def discriminator_kernel(x_ref,
                         w1_ref, b1_ref,
                         w2_ref, b2_ref,
                         w3_ref, b3_ref,
                         w4_ref, b4_ref,
                         o_ref):
    """One batch tile of the 4-layer MLP, fully fused in VMEM.

    bf16 MXU matmuls with f32 accumulation; bias add + LeakyReLU in f32;
    intermediate activations never leave VMEM.
    """
    h = jnp.dot(x_ref[...], w1_ref[...],
                preferred_element_type=jnp.float32) + b1_ref[...]
    h = _leaky_relu(h).astype(jnp.bfloat16)

    h = jnp.dot(h, w2_ref[...],
                preferred_element_type=jnp.float32) + b2_ref[...]
    h = _leaky_relu(h).astype(jnp.bfloat16)

    h = jnp.dot(h, w3_ref[...],
                preferred_element_type=jnp.float32) + b3_ref[...]
    h = _leaky_relu(h).astype(jnp.bfloat16)

    out = jnp.dot(h, w4_ref[...],
                  preferred_element_type=jnp.float32) + b4_ref[...]
    o_ref[...] = out.astype(o_ref.dtype)


def _pad2(a, rows, cols, dtype):
    r, c = a.shape
    if rows == r and cols == c:
        return a.astype(dtype)
    return jnp.pad(a, ((0, rows - r), (0, cols - c))).astype(dtype)


def discriminator_forward(x, params, *, batch_tile=256):
    """x: (B, data_dim) float32.  params: (in,out) f32 weights, (1,out) f32 biases."""
    B, data_dim = x.shape
    w1, b1 = params["w1"], params["b1"]
    w2, b2 = params["w2"], params["b2"]
    w3, b3 = params["w3"], params["b3"]
    w4, b4 = params["w4"], params["b4"]

    d1, d2, d3, d4 = w1.shape[1], w2.shape[1], w3.shape[1], w4.shape[1]

    # Pad every contraction / lane dimension up to a multiple of 128 lanes.
    k0p = _round_up(data_dim, _LANE)
    d1p = _round_up(d1, _LANE)
    d2p = _round_up(d2, _LANE)
    d3p = _round_up(d3, _LANE)
    d4p = _round_up(d4, _LANE)   # final layer: 1 -> 128 (lane-dense output store)

    # Batch tile: multiple of 8 sublanes; pad the batch so the grid divides it
    # exactly (tail rows are zero and get sliced off afterwards).
    tb = min(batch_tile, _round_up(B, _SUBLANE))
    bp = _round_up(B, tb)
    grid = (bp // tb,)

    x_p = _pad2(x, bp, k0p, jnp.bfloat16)
    w1_p = _pad2(w1, k0p, d1p, jnp.bfloat16)
    w2_p = _pad2(w2, d1p, d2p, jnp.bfloat16)
    w3_p = _pad2(w3, d2p, d3p, jnp.bfloat16)
    w4_p = _pad2(w4, d3p, d4p, jnp.bfloat16)
    b1_p = _pad2(b1, 1, d1p, jnp.float32)
    b2_p = _pad2(b2, 1, d2p, jnp.float32)
    b3_p = _pad2(b3, 1, d3p, jnp.float32)
    b4_p = _pad2(b4, 1, d4p, jnp.float32)

    def resident(shape):
        # Weights / biases: same block every grid step -> stay VMEM-resident.
        return pl.BlockSpec(shape, lambda i: (0, 0))

    # Advisory cost estimate for XLA's scheduler around the custom call.
    flops = 2 * bp * (k0p * d1p + d1p * d2p + d2p * d3p + d3p * d4p)
    bytes_accessed = (
        x_p.size * 2 + out_bytes(bp, d4p)
        + (w1_p.size + w2_p.size + w3_p.size + w4_p.size) * 2
        + (b1_p.size + b2_p.size + b3_p.size + b4_p.size) * 4
    )
    cost = pl.CostEstimate(flops=flops, transcendentals=0,
                           bytes_accessed=bytes_accessed)

    out_padded = pl.pallas_call(
        discriminator_kernel,
        out_shape=jax.ShapeDtypeStruct((bp, d4p), jnp.float32),
        grid=grid,
        in_specs=[
            pl.BlockSpec((tb, k0p), lambda i: (i, 0)),      # pipelined x tile
            resident((k0p, d1p)), resident((1, d1p)),
            resident((d1p, d2p)), resident((1, d2p)),
            resident((d2p, d3p)), resident((1, d3p)),
            resident((d3p, d4p)), resident((1, d4p)),
        ],
        out_specs=pl.BlockSpec((tb, d4p), lambda i: (i, 0)),
        compiler_params=pltpu.CompilerParams(
            dimension_semantics=("parallel",),   # megacore sharding on v7x
            vmem_limit_bytes=48 << 20,           # headroom under v7x's 64 MiB
        ),
        cost_estimate=cost,
    )(x_p, w1_p, b1_p, w2_p, b2_p, w3_p, b3_p, w4_p, b4_p)

    # Strip batch padding and the zero-padded lanes of the final layer.
    return out_padded[:B, :d4]


def out_bytes(rows, cols):
    return rows * cols * 4  # f32 output


def init_params(key, data_dim, hidden_dim):
    """Parameter init mimicking nn.Linear default (uniform ±1/sqrt(fan_in)), f32."""
    dims = [
        (data_dim, hidden_dim * 4),
        (hidden_dim * 4, hidden_dim * 2),
        (hidden_dim * 2, hidden_dim),
        (hidden_dim, 1),
    ]
    params = {}
    for i, (fan_in, fan_out) in enumerate(dims, start=1):
        key, kw, kb = jax.random.split(key, 3)
        bound = 1.0 / jnp.sqrt(jnp.float32(fan_in))
        params[f"w{i}"] = jax.random.uniform(
            kw, (fan_in, fan_out), jnp.float32, minval=-bound, maxval=bound)
        params[f"b{i}"] = jax.random.uniform(
            kb, (1, fan_out), jnp.float32, minval=-bound, maxval=bound)
    return params


def reference_forward(x, p):
    """Pure-JAX f32 reference of the PyTorch forward (correctness check)."""
    def lrelu(z):
        return jnp.where(z > 0, z, 0.2 * z)
    h = lrelu(x @ p["w1"] + p["b1"])
    h = lrelu(h @ p["w2"] + p["b2"])
    h = lrelu(h @ p["w3"] + p["b3"])
    return h @ p["w4"] + p["b4"]


if __name__ == "__main__":
    # Small shapes consistent with the module (data_dim / hidden_dim scaled down).
    BATCH = 8
    DATA_DIM = 256
    HIDDEN_DIM = 32

    key = jax.random.PRNGKey(0)
    key, kx = jax.random.split(key)
    x = jax.random.normal(kx, (BATCH, DATA_DIM), jnp.float32)

    params = init_params(key, DATA_DIM, HIDDEN_DIM)

    out = jax.block_until_ready(discriminator_forward(x, params))
    ref = reference_forward(x, params)

    assert out.shape == (BATCH, 1), out.shape
    max_err = float(jnp.max(jnp.abs(out - ref)))
    # bf16 matmul operands with f32 accumulation vs f32 reference -> loose tol.
    assert jnp.allclose(out, ref, atol=5e-2, rtol=5e-2), max_err

    print("KERNEL_OK")
</pallas_src>

<mosaic_0001>
module attributes {stable_mosaic.version = 11 : i64} {
  func.func @discriminator_kernel(%arg0: i32, %arg1: memref<8x256xbf16, #tpu.memory_space<vmem>>, %arg2: memref<256x128xbf16, #tpu.memory_space<vmem>>, %arg3: memref<1x128xf32, #tpu.memory_space<vmem>>, %arg4: memref<128x128xbf16, #tpu.memory_space<vmem>>, %arg5: memref<1x128xf32, #tpu.memory_space<vmem>>, %arg6: memref<128x128xbf16, #tpu.memory_space<vmem>>, %arg7: memref<1x128xf32, #tpu.memory_space<vmem>>, %arg8: memref<128x128xbf16, #tpu.memory_space<vmem>>, %arg9: memref<1x128xf32, #tpu.memory_space<vmem>>, %arg10: memref<8x128xf32, #tpu.memory_space<vmem>>) attributes {dimension_semantics = [#tpu.dimension_semantics<parallel>], iteration_bounds = array<i64: 1>, scalar_prefetch = 0 : i64, scratch_operands = 0 : i64, tpu.core_type = #tpu.core_type<tc>, window_params = [{transform_indices = @transform_0, window_bounds = array<i64: 8, 256>}, {pipeline_mode = #tpu.pipeline_mode<synchronous>, transform_indices = @transform_1, window_bounds = array<i64: 256, 128>}, {pipeline_mode = #tpu.pipeline_mode<synchronous>, transform_indices = @transform_2, window_bounds = array<i64: 1, 128>}, {pipeline_mode = #tpu.pipeline_mode<synchronous>, transform_indices = @transform_3, window_bounds = array<i64: 128, 128>}, {pipeline_mode = #tpu.pipeline_mode<synchronous>, transform_indices = @transform_4, window_bounds = array<i64: 1, 128>}, {pipeline_mode = #tpu.pipeline_mode<synchronous>, transform_indices = @transform_5, window_bounds = array<i64: 128, 128>}, {pipeline_mode = #tpu.pipeline_mode<synchronous>, transform_indices = @transform_6, window_bounds = array<i64: 1, 128>}, {pipeline_mode = #tpu.pipeline_mode<synchronous>, transform_indices = @transform_7, window_bounds = array<i64: 128, 128>}, {pipeline_mode = #tpu.pipeline_mode<synchronous>, transform_indices = @transform_8, window_bounds = array<i64: 1, 128>}, {transform_indices = @transform_9, window_bounds = array<i64: 8, 128>}]} {
    %c0 = arith.constant 0 : index
    %c0_0 = arith.constant 0 : index
    %0 = vector.load %arg1[%c0, %c0_0] : memref<8x256xbf16, #tpu.memory_space<vmem>>, vector<8x256xbf16>
    %c0_1 = arith.constant 0 : index
    %c0_2 = arith.constant 0 : index
    %1 = vector.load %arg2[%c0_1, %c0_2] : memref<256x128xbf16, #tpu.memory_space<vmem>>, vector<256x128xbf16>
    %cst = arith.constant dense<0.000000e+00> : vector<8x128xf32>
    %2 = tpu.matmul %0, %1, %cst {dimension_numbers = #tpu.dot_dimension_numbers<[1], [0], [0], [1], [0, 0, 1, 1], [], []>} : vector<8x256xbf16>, vector<256x128xbf16>, vector<8x128xf32> -> vector<8x128xf32>
    %c0_3 = arith.constant 0 : index
    %c0_4 = arith.constant 0 : index
    %3 = vector.load %arg3[%c0_3, %c0_4] : memref<1x128xf32, #tpu.memory_space<vmem>>, vector<1x128xf32>
    %4 = vector.broadcast %3 : vector<1x128xf32> to vector<8x128xf32>
    %5 = arith.addf %2, %4 : vector<8x128xf32>
    %cst_5 = arith.constant 0.000000e+00 : f32
    %6 = vector.broadcast %cst_5 : f32 to vector<8x128xf32>
    %7 = arith.cmpf ogt, %5, %6 : vector<8x128xf32>
    %cst_6 = arith.constant 2.000000e-01 : f32
    %8 = vector.broadcast %cst_6 : f32 to vector<8x128xf32>
    %9 = arith.mulf %8, %5 : vector<8x128xf32>
    %10 = arith.select %7, %5, %9 : vector<8x128xi1>, vector<8x128xf32>
    %11 = arith.truncf %10 : vector<8x128xf32> to vector<8x128xbf16>
    %c0_7 = arith.constant 0 : index
    %c0_8 = arith.constant 0 : index
    %12 = vector.load %arg4[%c0_7, %c0_8] : memref<128x128xbf16, #tpu.memory_space<vmem>>, vector<128x128xbf16>
    %cst_9 = arith.constant dense<0.000000e+00> : vector<8x128xf32>
    %13 = tpu.matmul %11, %12, %cst_9 {dimension_numbers = #tpu.dot_dimension_numbers<[1], [0], [0], [1], [0, 0, 1, 1], [], []>} : vector<8x128xbf16>, vector<128x128xbf16>, vector<8x128xf32> -> vector<8x128xf32>
    %c0_10 = arith.constant 0 : index
    %c0_11 = arith.constant 0 : index
    %14 = vector.load %arg5[%c0_10, %c0_11] : memref<1x128xf32, #tpu.memory_space<vmem>>, vector<1x128xf32>
    %15 = vector.broadcast %14 : vector<1x128xf32> to vector<8x128xf32>
    %16 = arith.addf %13, %15 : vector<8x128xf32>
    %cst_12 = arith.constant 0.000000e+00 : f32
    %17 = vector.broadcast %cst_12 : f32 to vector<8x128xf32>
    %18 = arith.cmpf ogt, %16, %17 : vector<8x128xf32>
    %cst_13 = arith.constant 2.000000e-01 : f32
    %19 = vector.broadcast %cst_13 : f32 to vector<8x128xf32>
    %20 = arith.mulf %19, %16 : vector<8x128xf32>
    %21 = arith.select %18, %16, %20 : vector<8x128xi1>, vector<8x128xf32>
    %22 = arith.truncf %21 : vector<8x128xf32> to vector<8x128xbf16>
    %c0_14 = arith.constant 0 : index
    %c0_15 = arith.constant 0 : index
    %23 = vector.load %arg6[%c0_14, %c0_15] : memref<128x128xbf16, #tpu.memory_space<vmem>>, vector<128x128xbf16>
    %cst_16 = arith.constant dense<0.000000e+00> : vector<8x128xf32>
    %24 = tpu.matmul %22, %23, %cst_16 {dimension_numbers = #tpu.dot_dimension_numbers<[1], [0], [0], [1], [0, 0, 1, 1], [], []>} : vector<8x128xbf16>, vector<128x128xbf16>, vector<8x128xf32> -> vector<8x128xf32>
    %c0_17 = arith.constant 0 : index
    %c0_18 = arith.constant 0 : index
    %25 = vector.load %arg7[%c0_17, %c0_18] : memref<1x128xf32, #tpu.memory_space<vmem>>, vector<1x128xf32>
    %26 = vector.broadcast %25 : vector<1x128xf32> to vector<8x128xf32>
    %27 = arith.addf %24, %26 : vector<8x128xf32>
    %cst_19 = arith.constant 0.000000e+00 : f32
    %28 = vector.broadcast %cst_19 : f32 to vector<8x128xf32>
    %29 = arith.cmpf ogt, %27, %28 : vector<8x128xf32>
    %cst_20 = arith.constant 2.000000e-01 : f32
    %30 = vector.broadcast %cst_20 : f32 to vector<8x128xf32>
    %31 = arith.mulf %30, %27 : vector<8x128xf32>
    %32 = arith.select %29, %27, %31 : vector<8x128xi1>, vector<8x128xf32>
    %33 = arith.truncf %32 : vector<8x128xf32> to vector<8x128xbf16>
    %c0_21 = arith.constant 0 : index
    %c0_22 = arith.constant 0 : index
    %34 = vector.load %arg8[%c0_21, %c0_22] : memref<128x128xbf16, #tpu.memory_space<vmem>>, vector<128x128xbf16>
    %cst_23 = arith.constant dense<0.000000e+00> : vector<8x128xf32>
    %35 = tpu.matmul %33, %34, %cst_23 {dimension_numbers = #tpu.dot_dimension_numbers<[1], [0], [0], [1], [0, 0, 1, 1], [], []>} : vector<8x128xbf16>, vector<128x128xbf16>, vector<8x128xf32> -> vector<8x128xf32>
    %c0_24 = arith.constant 0 : index
    %c0_25 = arith.constant 0 : index
    %36 = vector.load %arg9[%c0_24, %c0_25] : memref<1x128xf32, #tpu.memory_space<vmem>>, vector<1x128xf32>
    %37 = vector.broadcast %36 : vector<1x128xf32> to vector<8x128xf32>
    %38 = arith.addf %35, %37 : vector<8x128xf32>
    %c0_26 = arith.constant 0 : index
    %c0_27 = arith.constant 0 : index
    %39 = vector.load %arg10[%c0_26, %c0_27] : memref<8x128xf32, #tpu.memory_space<vmem>>, vector<8x128xf32>
    tpu.vector_store %arg10[%c0_26, %c0_27], %38 {strides = array<i32>} : memref<8x128xf32, #tpu.memory_space<vmem>>, vector<8x128xf32>,
    return
  }
  func.func @transform_0(%arg0: i32) -> (i32, i32) {
    %c0_i32 = arith.constant 0 : i32
    %c0_i32_0 = arith.constant 0 : i32
    return %arg0, %c0_i32 : i32, i32
  }
  func.func @transform_1(%arg0: i32) -> (i32, i32) {
    %c0_i32 = arith.constant 0 : i32
    %c0_i32_0 = arith.constant 0 : i32
    %c0_i32_1 = arith.constant 0 : i32
    return %c0_i32, %c0_i32_0 : i32, i32
  }
  func.func @transform_2(%arg0: i32) -> (i32, i32) {
    %c0_i32 = arith.constant 0 : i32
    %c0_i32_0 = arith.constant 0 : i32
    %c0_i32_1 = arith.constant 0 : i32
    return %c0_i32, %c0_i32_0 : i32, i32
  }
  func.func @transform_3(%arg0: i32) -> (i32, i32) {
    %c0_i32 = arith.constant 0 : i32
    %c0_i32_0 = arith.constant 0 : i32
    %c0_i32_1 = arith.constant 0 : i32
    return %c0_i32, %c0_i32_0 : i32, i32
  }
  func.func @transform_4(%arg0: i32) -> (i32, i32) {
    %c0_i32 = arith.constant 0 : i32
    %c0_i32_0 = arith.constant 0 : i32
    %c0_i32_1 = arith.constant 0 : i32
    return %c0_i32, %c0_i32_0 : i32, i32
  }
  func.func @transform_5(%arg0: i32) -> (i32, i32) {
    %c0_i32 = arith.constant 0 : i32
    %c0_i32_0 = arith.constant 0 : i32
    %c0_i32_1 = arith.constant 0 : i32
    return %c0_i32, %c0_i32_0 : i32, i32
  }
  func.func @transform_6(%arg0: i32) -> (i32, i32) {
    %c0_i32 = arith.constant 0 : i32
    %c0_i32_0 = arith.constant 0 : i32
    %c0_i32_1 = arith.constant 0 : i32
    return %c0_i32, %c0_i32_0 : i32, i32
  }
  func.func @transform_7(%arg0: i32) -> (i32, i32) {
    %c0_i32 = arith.constant 0 : i32
    %c0_i32_0 = arith.constant 0 : i32
    %c0_i32_1 = arith.constant 0 : i32
    return %c0_i32, %c0_i32_0 : i32, i32
  }
  func.func @transform_8(%arg0: i32) -> (i32, i32) {
    %c0_i32 = arith.constant 0 : i32
    %c0_i32_0 = arith.constant 0 : i32
    %c0_i32_1 = arith.constant 0 : i32
    return %c0_i32, %c0_i32_0 : i32, i32
  }
  func.func @transform_9(%arg0: i32) -> (i32, i32) {
    %c0_i32 = arith.constant 0 : i32
    %c0_i32_0 = arith.constant 0 : i32
    return %arg0, %c0_i32 : i32, i32
  }
}

</mosaic_0001>

<llo_original>
// kernel: tpu_custom_call.1
$region0: #{tpu_custom_call.1}
  #allocation0 [shape = 'u32[]', space=smem, size = 0x4, offset = 0x4, fixed_abs, tag = 'smem constant byte address 0x4 - core index']
  #allocation1 [shape = 'u32[144,128]{1,0:T(1,128)}', space=vmem, size = 0x12000, scoped, tag = 'internal scratch']
  %s0 = inlined_call_operand.hbm [shape: bf16[8,256], index: 0, kind: input, shape index: {}]
  %s1 = inlined_call_operand.hbm [shape: bf16[256,128], index: 1, kind: input, shape index: {}]
  %s2 = inlined_call_operand.vmem [shape: f32[1,128], index: 2, kind: input, shape index: {}]
  %s3 = inlined_call_operand.hbm [shape: bf16[128,128], index: 3, kind: input, shape index: {}]
  %s4 = inlined_call_operand.vmem [shape: f32[1,128], index: 4, kind: input, shape index: {}]
  %s5 = inlined_call_operand.hbm [shape: bf16[128,128], index: 5, kind: input, shape index: {}]
  %s6 = inlined_call_operand.vmem [shape: f32[1,128], index: 6, kind: input, shape index: {}]
  %s7 = inlined_call_operand.hbm [shape: bf16[128,128], index: 7, kind: input, shape index: {}]
  %s8 = inlined_call_operand.vmem [shape: f32[1,128], index: 8, kind: input, shape index: {}]
  %s9 = inlined_call_operand.hbm [shape: f32[8,128], index: 9, kind: output, shape index: {}]
  %s10 = sld [smem:[#allocation0]]
  $region66: #{tpu_custom_call.1} parent=0
    _
  %s12 = ssub.s32 1, %s10
  %s13 = scalar_select 0, %s12, %s10
  $region1: #{tpu_custom_call.1} parent=0
    #allocation2 [shape = 'u8[4096]{0}', space=vmem, size = 0x1000, scoped, tag = 'input window, operand 0, single buffered']
    #allocation3 [shape = 's32[1]{0}', space=sflag, size = 0x4, scoped, tag = 'scoped memory for tpu_custom_call.1']
    #allocation4 [shape = 's32[1]{0}', space=sflag, size = 0x4, scoped, tag = 'scoped memory for tpu_custom_call.1']
    #allocation5 [shape = 'u8[65536]{0}', space=vmem, size = 0x10000, scoped, tag = 'input window, operand 1, single buffered']
    #allocation6 [shape = 's32[1]{0}', space=sflag, size = 0x4, scoped, tag = 'scoped memory for tpu_custom_call.1']
    #allocation7 [shape = 'u8[32768]{0}', space=vmem, size = 0x8000, scoped, tag = 'input window, operand 3, single buffered']
    #allocation8 [shape = 'u8[32768]{0}', space=vmem, size = 0x8000, scoped, tag = 'input window, operand 5, single buffered']
    #allocation9 [shape = 's32[1]{0}', space=sflag, size = 0x4, scoped, tag = 'scoped memory for tpu_custom_call.1']
    #allocation10 [shape = 'u8[32768]{0}', space=vmem, size = 0x8000, scoped, tag = 'input window, operand 7, single buffered']
    #allocation11 [shape = 'u8[4096]{0}', space=vmem, size = 0x1000, scoped, tag = 'output window, operand 0, single buffered']
    %14 = vsyncpa [#allocation3], 0
    %15 = vsyncpa [#allocation6], 0
    %16 = vsyncpa [#allocation9], 0
    %17 = vsyncpa [#allocation4], 0
    // Predicated region
    $region2: #{tpu_custom_call.1} parent=1 // pred_check
      _
    $region3: #{tpu_custom_call.1} parent=1 // pred_check_branch
      %19 = sbr.rel (0) target = $region5
    $region4: #{tpu_custom_call.1} parent=1 // pred_region
      %s21 = ssub.s32 128, 128
      %22 = vsyncadd [#allocation3], %s21
      %s24 = sshll.u32 [#allocation2], 4
      %s25 = int_to_ptr.vmem [resolvable:$true] %s24
      %27 = dma.hbm_to_vmem [thread:$0]  %s0, 128, %s25, [#allocation3]
    $region5: #{tpu_custom_call.1} parent=1 // pred_fallthru
      _
    // Predicated region
    $region6: #{tpu_custom_call.1} parent=1 // pred_check
      _
    $region7: #{tpu_custom_call.1} parent=1 // pred_check_branch
      %29 = sbr.rel (0) target = $region9
    $region8: #{tpu_custom_call.1} parent=1 // pred_region
      %s31 = ssub.s32 2048, 2048
      %32 = vsyncadd [#allocation6], %s31
      %s33 = sshll.u32 [#allocation5], 4
      %s34 = int_to_ptr.vmem [resolvable:$true] %s33
      %39 = dma.hbm_to_vmem [thread:$0]  %s1, 2048, %s34, [#allocation6], 64, 64, 4
    $region9: #{tpu_custom_call.1} parent=1 // pred_fallthru
      _
    // Predicated region
    $region10: #{tpu_custom_call.1} parent=1 // pred_check
      _
    $region11: #{tpu_custom_call.1} parent=1 // pred_check_branch
      %41 = sbr.rel (0) target = $region13
    $region12: #{tpu_custom_call.1} parent=1 // pred_region
      _
    $region13: #{tpu_custom_call.1} parent=1 // pred_fallthru
      _
    // Predicated region
    $region14: #{tpu_custom_call.1} parent=1 // pred_check
      _
    $region15: #{tpu_custom_call.1} parent=1 // pred_check_branch
      %43 = sbr.rel (0) target = $region17
    $region16: #{tpu_custom_call.1} parent=1 // pred_region
      %s45 = ssub.s32 1024, 1024
      %46 = vsyncadd [#allocation6], %s45
      %s47 = sshll.u32 [#allocation7], 4
      %s48 = int_to_ptr.vmem [resolvable:$true] %s47
      %53 = dma.hbm_to_vmem [thread:$0]  %s3, 1024, %s48, [#allocation6], 64, 64, 4
    $region17: #{tpu_custom_call.1} parent=1 // pred_fallthru
      _
    // Predicated region
    $region18: #{tpu_custom_call.1} parent=1 // pred_check
      _
    $region19: #{tpu_custom_call.1} parent=1 // pred_check_branch
      %55 = sbr.rel (0) target = $region21
    $region20: #{tpu_custom_call.1} parent=1 // pred_region
      _
    $region21: #{tpu_custom_call.1} parent=1 // pred_fallthru
      _
    // Predicated region
    $region22: #{tpu_custom_call.1} parent=1 // pred_check
      _
    $region23: #{tpu_custom_call.1} parent=1 // pred_check_branch
      %57 = sbr.rel (0) target = $region25
    $region24: #{tpu_custom_call.1} parent=1 // pred_region
      %s59 = ssub.s32 1024, 1024
      %60 = vsyncadd [#allocation9], %s59
      %s61 = sshll.u32 [#allocation8], 4
      %s62 = int_to_ptr.vmem [resolvable:$true] %s61
      %67 = dma.hbm_to_vmem [thread:$0]  %s5, 1024, %s62, [#allocation9], 64, 64, 4
    $region25: #{tpu_custom_call.1} parent=1 // pred_fallthru
      _
    // Predicated region
    $region26: #{tpu_custom_call.1} parent=1 // pred_check
      _
    $region27: #{tpu_custom_call.1} parent=1 // pred_check_branch
      %69 = sbr.rel (0) target = $region29
    $region28: #{tpu_custom_call.1} parent=1 // pred_region
      _
    $region29: #{tpu_custom_call.1} parent=1 // pred_fallthru
      _
    // Predicated region
    $region30: #{tpu_custom_call.1} parent=1 // pred_check
      _
    $region31: #{tpu_custom_call.1} parent=1 // pred_check_branch
      %71 = sbr.rel (0) target = $region33
    $region32: #{tpu_custom_call.1} parent=1 // pred_region
      %s73 = ssub.s32 1024, 1024
      %74 = vsyncadd [#allocation9], %s73
      %s75 = sshll.u32 [#allocation10], 4
      %s76 = int_to_ptr.vmem [resolvable:$true] %s75
      %81 = dma.hbm_to_vmem [thread:$0]  %s7, 1024, %s76, [#allocation9], 64, 64, 4
    $region33: #{tpu_custom_call.1} parent=1 // pred_fallthru
      _
    // Predicated region
    $region34: #{tpu_custom_call.1} parent=1 // pred_check
      _
    $region35: #{tpu_custom_call.1} parent=1 // pred_check_branch
      %83 = sbr.rel (0) target = $region37
    $region36: #{tpu_custom_call.1} parent=1 // pred_region
      _
    $region37: #{tpu_custom_call.1} parent=1 // pred_fallthru
      _
    // Predicated region
    $region38: #{tpu_custom_call.1} parent=1 // pred_check
      _
    $region39: #{tpu_custom_call.1} parent=1 // pred_check_branch
      %85 = sbr.rel (0) target = $region41
    $region40: #{tpu_custom_call.1} parent=1 // pred_region
      %86 = dma.done [#allocation3], 128
    $region41: #{tpu_custom_call.1} parent=1 // pred_fallthru
      _
    // Predicated region
    $region42: #{tpu_custom_call.1} parent=1 // pred_check
      _
    $region43: #{tpu_custom_call.1} parent=1 // pred_check_branch
      %88 = sbr.rel (0) target = $region45
    $region44: #{tpu_custom_call.1} parent=1 // pred_region
      %89 = dma.done [#allocation6], 2048
    $region45: #{tpu_custom_call.1} parent=1 // pred_fallthru
      _
    // Predicated region
    $region46: #{tpu_custom_call.1} parent=1 // pred_check
      _
    $region47: #{tpu_custom_call.1} parent=1 // pred_check_branch
      %91 = sbr.rel (0) target = $region49
    $region48: #{tpu_custom_call.1} parent=1 // pred_region
      %92 = dma.done [#allocation6], 1024
    $region49: #{tpu_custom_call.1} parent=1 // pred_fallthru
      _
    // Predicated region
    $region50: #{tpu_custom_call.1} parent=1 // pred_check
      _
    $region51: #{tpu_custom_call.1} parent=1 // pred_check_branch
      %94 = sbr.rel (0) target = $region53
    $region52: #{tpu_custom_call.1} parent=1 // pred_region
      %95 = dma.done [#allocation9], 1024
    $region53: #{tpu_custom_call.1} parent=1 // pred_fallthru
      _
    // Predicated region
    $region54: #{tpu_custom_call.1} parent=1 // pred_check
      _
    $region55: #{tpu_custom_call.1} parent=1 // pred_check_branch
      %97 = sbr.rel (0) target = $region57
    $region56: #{tpu_custom_call.1} parent=1 // pred_region
      %98 = dma.done [#allocation9], 1024
    $region57: #{tpu_custom_call.1} parent=1 // pred_fallthru
      _
    %v100 = vld [vmem:[#allocation2] sm:$0xff]
    %v101 = vld [vmem:[#allocation5] sm:$0xf]
    %v102 = vld [vmem:[#allocation5 + $0x4] sm:$0xf]
    %v103 = vld [vmem:[#allocation5 + $0x8] sm:$0xf]
    %v104 = vld [vmem:[#allocation5 + $0xc] sm:$0xf]
    %v105 = vld [vmem:[#allocation5 + $0x10] sm:$0xf]
    %v106 = vld [vmem:[#allocation5 + $0x14] sm:$0xf]
    %v107 = vld [vmem:[#allocation5 + $0x18] sm:$0xf]
    %v108 = vld [vmem:[#allocation5 + $0x1c] sm:$0xf]
    %v109 = vld [vmem:[#allocation5 + $0x20] sm:$0xf]
    %v110 = vld [vmem:[#allocation5 + $0x24] sm:$0xf]
    %v111 = vld [vmem:[#allocation5 + $0x28] sm:$0xf]
    %v112 = vld [vmem:[#allocation5 + $0x2c] sm:$0xf]
    %v113 = vld [vmem:[#allocation5 + $0x30] sm:$0xf]
    %v114 = vld [vmem:[#allocation5 + $0x34] sm:$0xf]
    %v115 = vld [vmem:[#allocation5 + $0x38] sm:$0xf]
    %v116 = vld [vmem:[#allocation5 + $0x3c] sm:$0xf]
    %v117 = vld [vmem:[#allocation5 + $0x40] sm:$0xf]
    %v118 = vld [vmem:[#allocation5 + $0x44] sm:$0xf]
    %v119 = vld [vmem:[#allocation5 + $0x48] sm:$0xf]
    %v120 = vld [vmem:[#allocation5 + $0x4c] sm:$0xf]
    %v121 = vld [vmem:[#allocation5 + $0x50] sm:$0xf]
    %v122 = vld [vmem:[#allocation5 + $0x54] sm:$0xf]
    %v123 = vld [vmem:[#allocation5 + $0x58] sm:$0xf]
    %v124 = vld [vmem:[#allocation5 + $0x5c] sm:$0xf]
    %v125 = vld [vmem:[#allocation5 + $0x60] sm:$0xf]
    %v126 = vld [vmem:[#allocation5 + $0x64] sm:$0xf]
    %v127 = vld [vmem:[#allocation5 + $0x68] sm:$0xf]
    %v128 = vld [vmem:[#allocation5 + $0x6c] sm:$0xf]
    %v129 = vld [vmem:[#allocation5 + $0x70] sm:$0xf]
    %v130 = vld [vmem:[#allocation5 + $0x74] sm:$0xf]
    %v131 = vld [vmem:[#allocation5 + $0x78] sm:$0xf]
    %v132 = vld [vmem:[#allocation5 + $0x7c] sm:$0xf]
    %v133 = vld [vmem:[%s2] sm:$0x1]
    %v135 = vlaneseq
    %v136 = vshrl.u32 %v135, 7
    %v137 = vsub.s32 0, %v136
    %v138 = vrot.slane %v133, %v137
    %v141 = vunpack.c.l.b16 %v100
    %v142 = vunpack.c.h.b16 %v100
    %v143 = vpack.c.b16 %v141, %v141
    %v144 = vpack.c.b16 %v142, %v142
    %v179 = vunpack.c.l.b16 %v101
    %v180 = vunpack.c.l.b16 %v102
    %v181 = vunpack.c.l.b16 %v103
    %v182 = vunpack.c.l.b16 %v104
    %v183 = vunpack.c.l.b16 %v105
    %v184 = vunpack.c.l.b16 %v106
    %v185 = vunpack.c.l.b16 %v107
    %v186 = vunpack.c.l.b16 %v108
    %v187 = vunpack.c.l.b16 %v109
    %v188 = vunpack.c.l.b16 %v110
    %v189 = vunpack.c.l.b16 %v111
    %v190 = vunpack.c.l.b16 %v112
    %v191 = vunpack.c.l.b16 %v113
    %v192 = vunpack.c.l.b16 %v114
    %v193 = vunpack.c.l.b16 %v115
    %v194 = vunpack.c.l.b16 %v116
    %v195 = vunpack.c.l.b16 %v117
    %v196 = vunpack.c.l.b16 %v118
    %v197 = vunpack.c.l.b16 %v119
    %v198 = vunpack.c.l.b16 %v120
    %v199 = vunpack.c.l.b16 %v121
    %v200 = vunpack.c.l.b16 %v122
    %v201 = vunpack.c.l.b16 %v123
    %v202 = vunpack.c.l.b16 %v124
    %v203 = vunpack.c.l.b16 %v125
    %v204 = vunpack.c.l.b16 %v126
    %v205 = vunpack.c.l.b16 %v127
    %v206 = vunpack.c.l.b16 %v128
    %v207 = vunpack.c.l.b16 %v129
    %v208 = vunpack.c.l.b16 %v130
    %v209 = vunpack.c.l.b16 %v131
    %v210 = vunpack.c.l.b16 %v132
    %v211 = vpack.c.b16 %v180, %v179
    %v212 = vpack.c.b16 %v182, %v181
    %v213 = vpack.c.b16 %v184, %v183
    %v214 = vpack.c.b16 %v186, %v185
    %v215 = vpack.c.b16 %v188, %v187
    %v216 = vpack.c.b16 %v190, %v189
    %v217 = vpack.c.b16 %v192, %v191
    %v218 = vpack.c.b16 %v194, %v193
    %v219 = vpack.c.b16 %v196, %v195
    %v220 = vpack.c.b16 %v198, %v197
    %v221 = vpack.c.b16 %v200, %v199
    %v222 = vpack.c.b16 %v202, %v201
    %v223 = vpack.c.b16 %v204, %v203
    %v224 = vpack.c.b16 %v206, %v205
    %v225 = vpack.c.b16 %v208, %v207
    %v226 = vpack.c.b16 %v210, %v209
    %243 = vmatprep.subr.bf16.mxu0 0
    %244 = vmatpush1.bf16.msra.mxu0 %v218
    %245 = vmatprep.subr.bf16.mxu0 0
    %246 = vmatpush1.bf16.msra.mxu0 %v217
    %247 = vmatprep.subr.bf16.mxu0 0
    %248 = vmatpush1.bf16.msra.mxu0 %v216
    %249 = vmatprep.subr.bf16.mxu0 0
    %250 = vmatpush1.bf16.msra.mxu0 %v215
    %251 = vmatprep.subr.bf16.mxu0 0
    %252 = vmatpush1.bf16.msra.mxu0 %v214
    %253 = vmatprep.subr.bf16.mxu0 0
    %254 = vmatpush1.bf16.msra.mxu0 %v213
    %255 = vmatprep.subr.bf16.mxu0 0
    %256 = vmatpush1.bf16.msra.mxu0 %v212
    %257 = vmatprep.subr.bf16.mxu0 0
    %258 = vmatpush1.bf16.msra.mxu0 %v211
    %259 = vmatprep.subr.bf16.mxu0 0
    %260 = vmatpush2.bf16.msra.mxu0 %v226
    %261 = vmatprep.subr.bf16.mxu0 0
    %262 = vmatpush2.bf16.msra.mxu0 %v225
    %263 = vmatprep.subr.bf16.mxu0 0
    %264 = vmatpush2.bf16.msra.mxu0 %v224
    %265 = vmatprep.subr.bf16.mxu0 0
    %266 = vmatpush2.bf16.msra.mxu0 %v223
    %267 = vmatprep.subr.bf16.mxu0 0
    %268 = vmatpush2.bf16.msra.mxu0 %v222
    %269 = vmatprep.subr.bf16.mxu0 0
    %270 = vmatpush2.bf16.msra.mxu0 %v221
    %271 = vmatprep.subr.bf16.mxu0 0
    %272 = vmatpush2.bf16.msra.mxu0 %v220
    %273 = vmatprep.subr.bf16.mxu0 0
    %274 = vmatpush2.bf16.msra.mxu0 %v219
    %275 = vmatprep.mubr.bf16.mxu0 %v144
    %276 = vmatmul.mubr.bf16.gmra.mxu0 %v143
    %v277 = vpop.f32.mrf.mxu0
    %v278 = vadd.f32 %v138, %v277
    %v279 = vpop.f32.mrf.mxu0
    %v280 = vpop.f32.mrf.mxu0
    %v281 = vpop.f32.mrf.mxu0
    %282 = vdwg.mxu0
    %vm283 = vcmp.gt.f32.partialorder %v278, 0.0
    %v284 = vmul.f32 %v278, 0.2
    %v285 = vsel %vm283, %v278, %v284
    %v286 = vpack.c.bf16 %v285, %v285
    %v287 = vld [vmem:[#allocation7] sm:$0xf]
    %v288 = vld [vmem:[#allocation7 + $0x4] sm:$0xf]
    %v289 = vld [vmem:[#allocation7 + $0x8] sm:$0xf]
    %v290 = vld [vmem:[#allocation7 + $0xc] sm:$0xf]
    %v291 = vld [vmem:[#allocation7 + $0x10] sm:$0xf]
    %v292 = vld [vmem:[#allocation7 + $0x14] sm:$0xf]
    %v293 = vld [vmem:[#allocation7 + $0x18] sm:$0xf]
    %v294 = vld [vmem:[#allocation7 + $0x1c] sm:$0xf]
    %v295 = vld [vmem:[#allocation7 + $0x20] sm:$0xf]
    %v296 = vld [vmem:[#allocation7 + $0x24] sm:$0xf]
    %v297 = vld [vmem:[#allocation7 + $0x28] sm:$0xf]
    %v298 = vld [vmem:[#allocation7 + $0x2c] sm:$0xf]
    %v299 = vld [vmem:[#allocation7 + $0x30] sm:$0xf]
    %v300 = vld [vmem:[#allocation7 + $0x34] sm:$0xf]
    %v301 = vld [vmem:[#allocation7 + $0x38] sm:$0xf]
    %v302 = vld [vmem:[#allocation7 + $0x3c] sm:$0xf]
    %v303 = vld [vmem:[%s4] sm:$0x1]
    %v305 = vlaneseq
    %v306 = vshrl.u32 %v305, 7
    %v307 = vsub.s32 0, %v306
    %v308 = vrot.slane %v303, %v307
    %v326 = vunpack.c.l.b16 %v287
    %v327 = vunpack.c.l.b16 %v288
    %v328 = vunpack.c.l.b16 %v289
    %v329 = vunpack.c.l.b16 %v290
    %v330 = vunpack.c.l.b16 %v291
    %v331 = vunpack.c.l.b16 %v292
    %v332 = vunpack.c.l.b16 %v293
    %v333 = vunpack.c.l.b16 %v294
    %v334 = vunpack.c.l.b16 %v295
    %v335 = vunpack.c.l.b16 %v296
    %v336 = vunpack.c.l.b16 %v297
    %v337 = vunpack.c.l.b16 %v298
    %v338 = vunpack.c.l.b16 %v299
    %v339 = vunpack.c.l.b16 %v300
    %v340 = vunpack.c.l.b16 %v301
    %v341 = vunpack.c.l.b16 %v302
    %v342 = vpack.c.b16 %v327, %v326
    %v343 = vpack.c.b16 %v329, %v328
    %v344 = vpack.c.b16 %v331, %v330
    %v345 = vpack.c.b16 %v333, %v332
    %v346 = vpack.c.b16 %v335, %v334
    %v347 = vpack.c.b16 %v337, %v336
    %v348 = vpack.c.b16 %v339, %v338
    %v349 = vpack.c.b16 %v341, %v340
    %358 = vmatprep.subr.bf16.mxu0 0
    %359 = vmatpush1.bf16.msra.mxu0 %v349
    %360 = vmatprep.subr.bf16.mxu0 0
    %361 = vmatpush1.bf16.msra.mxu0 %v348
    %362 = vmatprep.subr.bf16.mxu0 0
    %363 = vmatpush1.bf16.msra.mxu0 %v347
    %364 = vmatprep.subr.bf16.mxu0 0
    %365 = vmatpush1.bf16.msra.mxu0 %v346
    %366 = vmatprep.subr.bf16.mxu0 0
    %367 = vmatpush1.bf16.msra.mxu0 %v345
    %368 = vmatprep.subr.bf16.mxu0 0
    %369 = vmatpush1.bf16.msra.mxu0 %v344
    %370 = vmatprep.subr.bf16.mxu0 0
    %371 = vmatpush1.bf16.msra.mxu0 %v343
    %372 = vmatprep.subr.bf16.mxu0 0
    %373 = vmatpush1.bf16.msra.mxu0 %v342
    %374 = vmatprep.subr.bf16.mxu0 0
    %375 = vmatpush2.bf16.msra.mxu0 0
    %376 = vmatprep.subr.bf16.mxu0 0
    %377 = vmatpush2.bf16.msra.mxu0 0
    %378 = vmatprep.subr.bf16.mxu0 0
    %379 = vmatpush2.bf16.msra.mxu0 0
    %380 = vmatprep.subr.bf16.mxu0 0
    %381 = vmatpush2.bf16.msra.mxu0 0
    %382 = vmatprep.subr.bf16.mxu0 0
    %383 = vmatpush2.bf16.msra.mxu0 0
    %384 = vmatprep.subr.bf16.mxu0 0
    %385 = vmatpush2.bf16.msra.mxu0 0
    %386 = vmatprep.subr.bf16.mxu0 0
    %387 = vmatpush2.bf16.msra.mxu0 0
    %388 = vmatprep.subr.bf16.mxu0 0
    %389 = vmatpush2.bf16.msra.mxu0 0
    %390 = vmatprep.mubr.bf16.mxu0 0
    %391 = vmatmul.mubr.bf16.gmra.mxu0 %v286
    %v392 = vpop.f32.mrf.mxu0
    %v393 = vadd.f32 %v308, %v392
    %v394 = vpop.f32.mrf.mxu0
    %v395 = vpop.f32.mrf.mxu0
    %v396 = vpop.f32.mrf.mxu0
    %397 = vdwg.mxu0
    %vm398 = vcmp.gt.f32.partialorder %v393, 0.0
    %v399 = vmul.f32 %v393, 0.2
    %v400 = vsel %vm398, %v393, %v399
    %v401 = vpack.c.bf16 %v400, %v400
    %v402 = vld [vmem:[#allocation8] sm:$0xf]
    %v403 = vld [vmem:[#allocation8 + $0x4] sm:$0xf]
    %v404 = vld [vmem:[#allocation8 + $0x8] sm:$0xf]
    %v405 = vld [vmem:[#allocation8 + $0xc] sm:$0xf]
    %v406 = vld [vmem:[#allocation8 + $0x10] sm:$0xf]
    %v407 = vld [vmem:[#allocation8 + $0x14] sm:$0xf]
    %v408 = vld [vmem:[#allocation8 + $0x18] sm:$0xf]
    %v409 = vld [vmem:[#allocation8 + $0x1c] sm:$0xf]
    %v410 = vld [vmem:[#allocation8 + $0x20] sm:$0xf]
    %v411 = vld [vmem:[#allocation8 + $0x24] sm:$0xf]
    %v412 = vld [vmem:[#allocation8 + $0x28] sm:$0xf]
    %v413 = vld [vmem:[#allocation8 + $0x2c] sm:$0xf]
    %v414 = vld [vmem:[#allocation8 + $0x30] sm:$0xf]
    %v415 = vld [vmem:[#allocation8 + $0x34] sm:$0xf]
    %v416 = vld [vmem:[#allocation8 + $0x38] sm:$0xf]
    %v417 = vld [vmem:[#allocation8 + $0x3c] sm:$0xf]
    %v418 = vld [vmem:[%s6] sm:$0x1]
    %v420 = vlaneseq
    %v421 = vshrl.u32 %v420, 7
    %v422 = vsub.s32 0, %v421
    %v423 = vrot.slane %v418, %v422
    %v441 = vunpack.c.l.b16 %v402
    %v442 = vunpack.c.l.b16 %v403
    %v443 = vunpack.c.l.b16 %v404
    %v444 = vunpack.c.l.b16 %v405
    %v445 = vunpack.c.l.b16 %v406
    %v446 = vunpack.c.l.b16 %v407
    %v447 = vunpack.c.l.b16 %v408
    %v448 = vunpack.c.l.b16 %v409
    %v449 = vunpack.c.l.b16 %v410
    %v450 = vunpack.c.l.b16 %v411
    %v451 = vunpack.c.l.b16 %v412
    %v452 = vunpack.c.l.b16 %v413
    %v453 = vunpack.c.l.b16 %v414
    %v454 = vunpack.c.l.b16 %v415
    %v455 = vunpack.c.l.b16 %v416
    %v456 = vunpack.c.l.b16 %v417
    %v457 = vpack.c.b16 %v442, %v441
    %v458 = vpack.c.b16 %v444, %v443
    %v459 = vpack.c.b16 %v446, %v445
    %v460 = vpack.c.b16 %v448, %v447
    %v461 = vpack.c.b16 %v450, %v449
    %v462 = vpack.c.b16 %v452, %v451
    %v463 = vpack.c.b16 %v454, %v453
    %v464 = vpack.c.b16 %v456, %v455
    %473 = vmatprep.subr.bf16.mxu0 0
    %474 = vmatpush1.bf16.msra.mxu0 %v464
    %475 = vmatprep.subr.bf16.mxu0 0
    %476 = vmatpush1.bf16.msra.mxu0 %v463
    %477 = vmatprep.subr.bf16.mxu0 0
    %478 = vmatpush1.bf16.msra.mxu0 %v462
    %479 = vmatprep.subr.bf16.mxu0 0
    %480 = vmatpush1.bf16.msra.mxu0 %v461
    %481 = vmatprep.subr.bf16.mxu0 0
    %482 = vmatpush1.bf16.msra.mxu0 %v460
    %483 = vmatprep.subr.bf16.mxu0 0
    %484 = vmatpush1.bf16.msra.mxu0 %v459
    %485 = vmatprep.subr.bf16.mxu0 0
    %486 = vmatpush1.bf16.msra.mxu0 %v458
    %487 = vmatprep.subr.bf16.mxu0 0
    %488 = vmatpush1.bf16.msra.mxu0 %v457
    %489 = vmatprep.subr.bf16.mxu0 0
    %490 = vmatpush2.bf16.msra.mxu0 0
    %491 = vmatprep.subr.bf16.mxu0 0
    %492 = vmatpush2.bf16.msra.mxu0 0
    %493 = vmatprep.subr.bf16.mxu0 0
    %494 = vmatpush2.bf16.msra.mxu0 0
    %495 = vmatprep.subr.bf16.mxu0 0
    %496 = vmatpush2.bf16.msra.mxu0 0
    %497 = vmatprep.subr.bf16.mxu0 0
    %498 = vmatpush2.bf16.msra.mxu0 0
    %499 = vmatprep.subr.bf16.mxu0 0
    %500 = vmatpush2.bf16.msra.mxu0 0
    %501 = vmatprep.subr.bf16.mxu0 0
    %502 = vmatpush2.bf16.msra.mxu0 0
    %503 = vmatprep.subr.bf16.mxu0 0
    %504 = vmatpush2.bf16.msra.mxu0 0
    %505 = vmatprep.mubr.bf16.mxu0 0
    %506 = vmatmul.mubr.bf16.gmra.mxu0 %v401
    %v507 = vpop.f32.mrf.mxu0
    %v508 = vadd.f32 %v423, %v507
    %v509 = vpop.f32.mrf.mxu0
    %v510 = vpop.f32.mrf.mxu0
    %v511 = vpop.f32.mrf.mxu0
    %512 = vdwg.mxu0
    %vm513 = vcmp.gt.f32.partialorder %v508, 0.0
    %v514 = vmul.f32 %v508, 0.2
    %v515 = vsel %vm513, %v508, %v514
    %v516 = vpack.c.bf16 %v515, %v515
    %v517 = vld [vmem:[#allocation10] sm:$0xf]
    %v518 = vld [vmem:[#allocation10 + $0x4] sm:$0xf]
    %v519 = vld [vmem:[#allocation10 + $0x8] sm:$0xf]
    %v520 = vld [vmem:[#allocation10 + $0xc] sm:$0xf]
    %v521 = vld [vmem:[#allocation10 + $0x10] sm:$0xf]
    %v522 = vld [vmem:[#allocation10 + $0x14] sm:$0xf]
    %v523 = vld [vmem:[#allocation10 + $0x18] sm:$0xf]
    %v524 = vld [vmem:[#allocation10 + $0x1c] sm:$0xf]
    %v525 = vld [vmem:[#allocation10 + $0x20] sm:$0xf]
    %v526 = vld [vmem:[#allocation10 + $0x24] sm:$0xf]
    %v527 = vld [vmem:[#allocation10 + $0x28] sm:$0xf]
    %v528 = vld [vmem:[#allocation10 + $0x2c] sm:$0xf]
    %v529 = vld [vmem:[#allocation10 + $0x30] sm:$0xf]
    %v530 = vld [vmem:[#allocation10 + $0x34] sm:$0xf]
    %v531 = vld [vmem:[#allocation10 + $0x38] sm:$0xf]
    %v532 = vld [vmem:[#allocation10 + $0x3c] sm:$0xf]
    %v533 = vld [vmem:[%s8] sm:$0x1]
    %v535 = vlaneseq
    %v536 = vshrl.u32 %v535, 7
    %v537 = vsub.s32 0, %v536
    %v538 = vrot.slane %v533, %v537
    %v556 = vunpack.c.l.b16 %v517
    %v557 = vunpack.c.l.b16 %v518
    %v558 = vunpack.c.l.b16 %v519
    %v559 = vunpack.c.l.b16 %v520
    %v560 = vunpack.c.l.b16 %v521
    %v561 = vunpack.c.l.b16 %v522
    %v562 = vunpack.c.l.b16 %v523
    %v563 = vunpack.c.l.b16 %v524
    %v564 = vunpack.c.l.b16 %v525
    %v565 = vunpack.c.l.b16 %v526
    %v566 = vunpack.c.l.b16 %v527
    %v567 = vunpack.c.l.b16 %v528
    %v568 = vunpack.c.l.b16 %v529
    %v569 = vunpack.c.l.b16 %v530
    %v570 = vunpack.c.l.b16 %v531
    %v571 = vunpack.c.l.b16 %v532
    %v572 = vpack.c.b16 %v557, %v556
    %v573 = vpack.c.b16 %v559, %v558
    %v574 = vpack.c.b16 %v561, %v560
    %v575 = vpack.c.b16 %v563, %v562
    %v576 = vpack.c.b16 %v565, %v564
    %v577 = vpack.c.b16 %v567, %v566
    %v578 = vpack.c.b16 %v569, %v568
    %v579 = vpack.c.b16 %v571, %v570
    %588 = vmatprep.subr.bf16.mxu0 0
    %589 = vmatpush1.bf16.msra.mxu0 %v579
    %590 = vmatprep.subr.bf16.mxu0 0
    %591 = vmatpush1.bf16.msra.mxu0 %v578
    %592 = vmatprep.subr.bf16.mxu0 0
    %593 = vmatpush1.bf16.msra.mxu0 %v577
    %594 = vmatprep.subr.bf16.mxu0 0
    %595 = vmatpush1.bf16.msra.mxu0 %v576
    %596 = vmatprep.subr.bf16.mxu0 0
    %597 = vmatpush1.bf16.msra.mxu0 %v575
    %598 = vmatprep.subr.bf16.mxu0 0
    %599 = vmatpush1.bf16.msra.mxu0 %v574
    %600 = vmatprep.subr.bf16.mxu0 0
    %601 = vmatpush1.bf16.msra.mxu0 %v573
    %602 = vmatprep.subr.bf16.mxu0 0
    %603 = vmatpush1.bf16.msra.mxu0 %v572
    %604 = vmatprep.subr.bf16.mxu0 0
    %605 = vmatpush2.bf16.msra.mxu0 0
    %606 = vmatprep.subr.bf16.mxu0 0
    %607 = vmatpush2.bf16.msra.mxu0 0
    %608 = vmatprep.subr.bf16.mxu0 0
    %609 = vmatpush2.bf16.msra.mxu0 0
    %610 = vmatprep.subr.bf16.mxu0 0
    %611 = vmatpush2.bf16.msra.mxu0 0
    %612 = vmatprep.subr.bf16.mxu0 0
    %613 = vmatpush2.bf16.msra.mxu0 0
    %614 = vmatprep.subr.bf16.mxu0 0
    %615 = vmatpush2.bf16.msra.mxu0 0
    %616 = vmatprep.subr.bf16.mxu0 0
    %617 = vmatpush2.bf16.msra.mxu0 0
    %618 = vmatprep.subr.bf16.mxu0 0
    %619 = vmatpush2.bf16.msra.mxu0 0
    %620 = vmatprep.mubr.bf16.mxu0 0
    %621 = vmatmul.mubr.bf16.gmra.mxu0 %v516
    %v622 = vpop.f32.mrf.mxu0
    %v623 = vadd.f32 %v538, %v622
    %v624 = vpop.f32.mrf.mxu0
    %v625 = vpop.f32.mrf.mxu0
    %v626 = vpop.f32.mrf.mxu0
    %627 = vdwg.mxu0
    %628 = vst [vmem:[#allocation11] sm:$0xff] %v623
    // Predicated region
    $region58: #{tpu_custom_call.1} parent=1 // pred_check
      _
    $region59: #{tpu_custom_call.1} parent=1 // pred_check_branch
      %630 = sbr.rel (0) target = $region61
    $region60: #{tpu_custom_call.1} parent=1 // pred_region
      %s632 = ssub.s32 128, 128
      %633 = vsyncadd [#allocation4], %s632
      %s635 = sshll.u32 [#allocation11], 4
      %s636 = int_to_ptr.vmem [resolvable:$true] %s635
      %638 = dma.vmem_to_hbm [thread:$0]  %s636, 128, %s9, [#allocation4]
    $region61: #{tpu_custom_call.1} parent=1 // pred_fallthru
      _
    // Predicated region
    $region62: #{tpu_custom_call.1} parent=1 // pred_check
      _
    $region63: #{tpu_custom_call.1} parent=1 // pred_check_branch
      %640 = sbr.rel (0) target = $region65
    $region64: #{tpu_custom_call.1} parent=1 // pred_region
      %641 = dma.done [#allocation4], 128
    $region65: #{tpu_custom_call.1} parent=1 // pred_fallthru
      _
    %642 = vsyncpa [#allocation3], 1
    %643 = vsyncpa [#allocation6], 1
    %644 = vsyncpa [#allocation9], 1
    %645 = vsyncpa [#allocation4], 1

</llo_original>
